<compile_context>
chip_gen: v5e
topology: v5e:2x2
jax: 0.10.0
libtpu: 0.0.40
codegen_flags: <defaults>
</compile_context>

<pallas_src>
import jax
import jax.numpy as jnp
from jax.experimental import pallas as pl
from jax.experimental.pallas import tpu as pltpu

_EPS = 1e-5          # PyTorch BatchNorm1d default eps
_H1, _H2 = 192, 64   # fc1 / fc2 widths (fixed by the module)
_ROW_BLOCK = 128     # rows per grid step for the large-batch path (fits v5e/v6e/v7x MXU)


def _fused_forward_kernel(x_ref, w1_ref, w2_ref, w3_ref, bias_ref, sc_ref, o_ref):
    """Fused fc1 -> bn1 -> relu -> fc2 -> bn2 -> relu -> fc3.

    Every row of x_ref is an independent forward() call of the original module
    (batch=1, num_securities=1), so BatchNorm statistics are per-row reductions.
    sc_ref (SMEM) = [gamma1, beta1, gamma2, beta2, b3].
    """
    xb = x_ref[...].astype(jnp.bfloat16)           # MXU operands in bf16, math stays f32
    bias = bias_ref[...]                           # (1, 256) = [b1 (192) | b2 (64)]

    # ---- fc1 + bn1 (training-mode batch stats) + relu ----------------------
    h1 = jnp.dot(xb, w1_ref[...], preferred_element_type=jnp.float32) + bias[:, :_H1]
    m1 = jnp.mean(h1, axis=1, keepdims=True)
    v1 = jnp.maximum(jnp.mean(h1 * h1, axis=1, keepdims=True) - m1 * m1, 0.0)
    s1 = sc_ref[0] * jax.lax.rsqrt(v1 + _EPS)      # folded BN affine: y = h*s + t
    t1 = sc_ref[1] - m1 * s1
    a1 = jnp.maximum(h1 * s1 + t1, 0.0)

    # ---- fc2 + bn2 + relu ---------------------------------------------------
    h2 = jnp.dot(a1.astype(jnp.bfloat16), w2_ref[...],
                 preferred_element_type=jnp.float32) + bias[:, _H1:]
    m2 = jnp.mean(h2, axis=1, keepdims=True)
    v2 = jnp.maximum(jnp.mean(h2 * h2, axis=1, keepdims=True) - m2 * m2, 0.0)
    s2 = sc_ref[2] * jax.lax.rsqrt(v2 + _EPS)
    t2 = sc_ref[3] - m2 * s2
    a2 = jnp.maximum(h2 * s2 + t2, 0.0)

    # ---- fc3 (out.view(-1) is exactly the per-row (64,) vector) -------------
    o_ref[...] = (jnp.dot(a2.astype(jnp.bfloat16), w3_ref[...],
                          preferred_element_type=jnp.float32) + sc_ref[4])


def init_params(key, num_features, num_securities):
    """Deterministic synthetic parameters matching the PyTorch layer shapes."""
    ks = jax.random.split(key, 10)

    def u(k, shape, fan_in):
        bound = 1.0 / jnp.sqrt(jnp.float32(fan_in))
        return jax.random.uniform(k, shape, jnp.float32, -bound, bound)

    return {
        # Linear weights in PyTorch layout (out_features, in_features)
        "w1": u(ks[0], (_H1, num_features), num_features),
        "b1": u(ks[1], (_H1,), num_features),
        "w2": u(ks[2], (_H2, _H1), _H1),
        "b2": u(ks[3], (_H2,), _H1),
        "w3": u(ks[4], (num_securities, _H2), _H2),
        "b3": u(ks[5], (num_securities,), _H2),
        # BatchNorm affine parameters (per security channel)
        "g1":  1.0 + 0.1 * jax.random.normal(ks[6], (num_securities,), jnp.float32),
        "be1": 0.1 * jax.random.normal(ks[7], (num_securities,), jnp.float32),
        "g2":  1.0 + 0.1 * jax.random.normal(ks[8], (num_securities,), jnp.float32),
        "be2": 0.1 * jax.random.normal(ks[9], (num_securities,), jnp.float32),
    }


def prepare_params(params):
    """One-time layout work: transpose weights, cast to bf16, pack biases + BN scalars.

    Done once at init so the per-call path has no XLA transposes/reshapes and only
    6 kernel operands (x, w1T, w2T, w3T, bias_row, sc).
    """
    S = params["w3"].shape[0]
    assert S == 1, "fc3(out.view(-1)) requires num_securities == 1"
    bias_row = jnp.concatenate([params["b1"], params["b2"]]).reshape(1, _H1 + _H2)
    sc = jnp.stack([params["g1"][0], params["be1"][0],
                    params["g2"][0], params["be2"][0],
                    params["b3"][0]]).astype(jnp.float32)
    return {
        "w1T": jnp.asarray(params["w1"].T, jnp.bfloat16),   # (F, 192)
        "w2T": jnp.asarray(params["w2"].T, jnp.bfloat16),   # (192, 64)
        "w3T": jnp.asarray(params["w3"].T, jnp.bfloat16),   # (64, S)
        "bias": bias_row.astype(jnp.float32),                # (1, 256) VMEM = [b1 | b2]
        "sc": sc,                                            # (5,) SMEM = [g1,be1,g2,be2,b3]
    }


@jax.jit
def linear_stock_model_forward_batched(x2, prepared):
    """x2: (M, F) float32 -- M independent forward() calls of the original module."""
    M, F = x2.shape
    S = prepared["w3T"].shape[1]
    smem_spec = pl.BlockSpec(memory_space=pltpu.MemorySpace.SMEM)

    if M > _ROW_BLOCK:
        # Large-batch path: pad rows to a multiple of the block, grid over row blocks.
        # "parallel" lets megacore / v7x's two TensorCores shard the rows.  Weights and
        # bias keep a constant block index, so they stay resident in VMEM across steps.
        Mp = ((M + _ROW_BLOCK - 1) // _ROW_BLOCK) * _ROW_BLOCK
        xp = x2 if Mp == M else jnp.pad(x2, ((0, Mp - M), (0, 0)))
        full = lambda arr: pl.BlockSpec(arr.shape, lambda i, _nd=arr.ndim: (0,) * _nd)
        out = pl.pallas_call(
            _fused_forward_kernel,
            out_shape=jax.ShapeDtypeStruct((Mp, S), jnp.float32),
            grid=(Mp // _ROW_BLOCK,),
            in_specs=[pl.BlockSpec((_ROW_BLOCK, F), lambda i: (i, 0)),
                      full(prepared["w1T"]), full(prepared["w2T"]), full(prepared["w3T"]),
                      full(prepared["bias"]),
                      smem_spec],
            out_specs=pl.BlockSpec((_ROW_BLOCK, S), lambda i: (i, 0)),
            compiler_params=pltpu.CompilerParams(dimension_semantics=("parallel",)),
        )(xp, prepared["w1T"], prepared["w2T"], prepared["w3T"],
          prepared["bias"], prepared["sc"])
        return out if Mp == M else out[:M]

    # Small-batch path: single invocation, whole-array VMEM blocks (everything is tiny).
    vspec = pl.BlockSpec(memory_space=pltpu.MemorySpace.VMEM)
    return pl.pallas_call(
        _fused_forward_kernel,
        out_shape=jax.ShapeDtypeStruct((M, S), jnp.float32),
        in_specs=[vspec, vspec, vspec, vspec, vspec, smem_spec],
        out_specs=vspec,
    )(x2, prepared["w1T"], prepared["w2T"], prepared["w3T"],
      prepared["bias"], prepared["sc"])


def linear_stock_model_forward(x, prepared):
    """Exact semantics of LinearStockModel.forward for x of shape (batch, num_sec, F)."""
    B, S, F = x.shape
    # out.view(-1) before fc3 (in_features=64) only runs when batch*num_securities == 1.
    assert B * S == 1, "fc3(out.view(-1)) requires batch * num_securities == 1"
    out = linear_stock_model_forward_batched(x.reshape(B * S, F).astype(jnp.float32),
                                             prepared)
    return out.reshape(-1)  # (num_securities,)


# TODO(synk): BatchNorm1d running-mean/var (momentum) state updates are a training-time
# side effect and are not modeled; the forward uses batch statistics, as in train mode.

if __name__ == "__main__":
    num_features = 32
    num_securities = 1   # forced by out.view(-1) -> Linear(64, num_securities)
    batch = 1

    key = jax.random.PRNGKey(0)
    k_x, k_p, k_b = jax.random.split(key, 3)
    x = jax.random.normal(k_x, (batch, num_securities, num_features), jnp.float32)
    params = init_params(k_p, num_features, num_securities)
    prepared = prepare_params(params)   # one-time layout / packing work

    # Single forward() call — original module semantics.
    out = linear_stock_model_forward(x, prepared)
    jax.block_until_ready(out)
    assert out.shape == (num_securities,)
    assert bool(jnp.all(jnp.isfinite(out)))

    # Batched path: 256 independent forward() calls fused into one kernel
    # (grid of 128-row blocks, "parallel" over row blocks).
    xb = jax.random.normal(k_b, (256, num_features), jnp.float32)
    outs = linear_stock_model_forward_batched(xb, prepared)
    jax.block_until_ready(outs)
    assert outs.shape == (256, num_securities)
    assert bool(jnp.all(jnp.isfinite(outs)))

    print("KERNEL_OK")
</pallas_src>

<mosaic_0001>
module attributes {stable_mosaic.version = 11 : i64} {
  func.func @_fused_forward_kernel(%arg0: memref<1x32xf32, #tpu.memory_space<vmem>>, %arg1: memref<32x192xbf16, #tpu.memory_space<vmem>>, %arg2: memref<192x64xbf16, #tpu.memory_space<vmem>>, %arg3: memref<64x1xbf16, #tpu.memory_space<vmem>>, %arg4: memref<1x256xf32, #tpu.memory_space<vmem>>, %arg5: memref<5xf32, #tpu.memory_space<smem>>, %arg6: memref<1x1xf32, #tpu.memory_space<vmem>>) attributes {dimension_semantics = [], scalar_prefetch = 0 : i64, scratch_operands = 0 : i64, tpu.core_type = #tpu.core_type<tc>} {
    %c0 = arith.constant 0 : index
    %c0_0 = arith.constant 0 : index
    %0 = vector.load %arg0[%c0, %c0_0] : memref<1x32xf32, #tpu.memory_space<vmem>>, vector<1x32xf32>
    %1 = arith.truncf %0 : vector<1x32xf32> to vector<1x32xbf16>
    %c0_1 = arith.constant 0 : index
    %c0_2 = arith.constant 0 : index
    %2 = vector.load %arg4[%c0_1, %c0_2] : memref<1x256xf32, #tpu.memory_space<vmem>>, vector<1x256xf32>
    %c0_3 = arith.constant 0 : index
    %c0_4 = arith.constant 0 : index
    %3 = vector.load %arg1[%c0_3, %c0_4] : memref<32x192xbf16, #tpu.memory_space<vmem>>, vector<32x192xbf16>
    %cst = arith.constant dense<0.000000e+00> : vector<1x192xf32>
    %4 = tpu.matmul %1, %3, %cst {dimension_numbers = #tpu.dot_dimension_numbers<[1], [0], [0], [1], [0, 0, 1, 1], [], []>} : vector<1x32xbf16>, vector<32x192xbf16>, vector<1x192xf32> -> vector<1x192xf32>
    %5 = vector.extract_strided_slice %2 {offsets = [0, 0], sizes = [1, 192], strides = [1, 1]} : vector<1x256xf32> to vector<1x192xf32>
    %6 = arith.addf %4, %5 : vector<1x192xf32>
    %cst_5 = arith.constant dense<0.000000e+00> : vector<1xf32>
    %7 = vector.multi_reduction <add>, %6, %cst_5 [1] : vector<1x192xf32> to vector<1xf32>
    %8 = vector.shape_cast %7 : vector<1xf32> to vector<1x1xf32>
    %cst_6 = arith.constant 1.920000e+02 : f32
    %9 = vector.broadcast %cst_6 : f32 to vector<1x1xf32>
    %10 = arith.divf %8, %9 : vector<1x1xf32>
    %11 = arith.mulf %6, %6 : vector<1x192xf32>
    %cst_7 = arith.constant dense<0.000000e+00> : vector<1xf32>
    %12 = vector.multi_reduction <add>, %11, %cst_7 [1] : vector<1x192xf32> to vector<1xf32>
    %13 = vector.shape_cast %12 : vector<1xf32> to vector<1x1xf32>
    %cst_8 = arith.constant 1.920000e+02 : f32
    %14 = vector.broadcast %cst_8 : f32 to vector<1x1xf32>
    %15 = arith.divf %13, %14 : vector<1x1xf32>
    %16 = arith.mulf %10, %10 : vector<1x1xf32>
    %17 = arith.subf %15, %16 : vector<1x1xf32>
    %cst_9 = arith.constant 0.000000e+00 : f32
    %18 = vector.broadcast %cst_9 : f32 to vector<1x1xf32>
    %19 = arith.maximumf %17, %18 : vector<1x1xf32>
    %c0_10 = arith.constant 0 : index
    %20 = memref.load %arg5[%c0_10] : memref<5xf32, #tpu.memory_space<smem>>
    %cst_11 = arith.constant 9.99999974E-6 : f32
    %21 = vector.broadcast %cst_11 : f32 to vector<1x1xf32>
    %22 = arith.addf %19, %21 : vector<1x1xf32>
    %23 = math.rsqrt %22 : vector<1x1xf32>
    %24 = vector.broadcast %20 : f32 to vector<1x1xf32>
    %25 = arith.mulf %24, %23 : vector<1x1xf32>
    %c1 = arith.constant 1 : index
    %26 = memref.load %arg5[%c1] : memref<5xf32, #tpu.memory_space<smem>>
    %27 = arith.mulf %10, %25 : vector<1x1xf32>
    %28 = vector.broadcast %26 : f32 to vector<1x1xf32>
    %29 = arith.subf %28, %27 : vector<1x1xf32>
    %30 = vector.broadcast %25 : vector<1x1xf32> to vector<1x192xf32>
    %31 = arith.mulf %6, %30 : vector<1x192xf32>
    %32 = vector.broadcast %29 : vector<1x1xf32> to vector<1x192xf32>
    %33 = arith.addf %31, %32 : vector<1x192xf32>
    %cst_12 = arith.constant 0.000000e+00 : f32
    %34 = vector.broadcast %cst_12 : f32 to vector<1x192xf32>
    %35 = arith.maximumf %33, %34 : vector<1x192xf32>
    %36 = arith.truncf %35 : vector<1x192xf32> to vector<1x192xbf16>
    %c0_13 = arith.constant 0 : index
    %c0_14 = arith.constant 0 : index
    %37 = vector.load %arg2[%c0_13, %c0_14] : memref<192x64xbf16, #tpu.memory_space<vmem>>, vector<192x64xbf16>
    %cst_15 = arith.constant dense<0.000000e+00> : vector<1x64xf32>
    %38 = tpu.matmul %36, %37, %cst_15 {dimension_numbers = #tpu.dot_dimension_numbers<[1], [0], [0], [1], [0, 0, 1, 1], [], []>} : vector<1x192xbf16>, vector<192x64xbf16>, vector<1x64xf32> -> vector<1x64xf32>
    %39 = vector.extract_strided_slice %2 {offsets = [0, 192], sizes = [1, 64], strides = [1, 1]} : vector<1x256xf32> to vector<1x64xf32>
    %40 = arith.addf %38, %39 : vector<1x64xf32>
    %cst_16 = arith.constant dense<0.000000e+00> : vector<1xf32>
    %41 = vector.multi_reduction <add>, %40, %cst_16 [1] : vector<1x64xf32> to vector<1xf32>
    %42 = vector.shape_cast %41 : vector<1xf32> to vector<1x1xf32>
    %cst_17 = arith.constant 6.400000e+01 : f32
    %43 = vector.broadcast %cst_17 : f32 to vector<1x1xf32>
    %44 = arith.divf %42, %43 : vector<1x1xf32>
    %45 = arith.mulf %40, %40 : vector<1x64xf32>
    %cst_18 = arith.constant dense<0.000000e+00> : vector<1xf32>
    %46 = vector.multi_reduction <add>, %45, %cst_18 [1] : vector<1x64xf32> to vector<1xf32>
    %47 = vector.shape_cast %46 : vector<1xf32> to vector<1x1xf32>
    %cst_19 = arith.constant 6.400000e+01 : f32
    %48 = vector.broadcast %cst_19 : f32 to vector<1x1xf32>
    %49 = arith.divf %47, %48 : vector<1x1xf32>
    %50 = arith.mulf %44, %44 : vector<1x1xf32>
    %51 = arith.subf %49, %50 : vector<1x1xf32>
    %cst_20 = arith.constant 0.000000e+00 : f32
    %52 = vector.broadcast %cst_20 : f32 to vector<1x1xf32>
    %53 = arith.maximumf %51, %52 : vector<1x1xf32>
    %c2 = arith.constant 2 : index
    %54 = memref.load %arg5[%c2] : memref<5xf32, #tpu.memory_space<smem>>
    %cst_21 = arith.constant 9.99999974E-6 : f32
    %55 = vector.broadcast %cst_21 : f32 to vector<1x1xf32>
    %56 = arith.addf %53, %55 : vector<1x1xf32>
    %57 = math.rsqrt %56 : vector<1x1xf32>
    %58 = vector.broadcast %54 : f32 to vector<1x1xf32>
    %59 = arith.mulf %58, %57 : vector<1x1xf32>
    %c3 = arith.constant 3 : index
    %60 = memref.load %arg5[%c3] : memref<5xf32, #tpu.memory_space<smem>>
    %61 = arith.mulf %44, %59 : vector<1x1xf32>
    %62 = vector.broadcast %60 : f32 to vector<1x1xf32>
    %63 = arith.subf %62, %61 : vector<1x1xf32>
    %64 = vector.broadcast %59 : vector<1x1xf32> to vector<1x64xf32>
    %65 = arith.mulf %40, %64 : vector<1x64xf32>
    %66 = vector.broadcast %63 : vector<1x1xf32> to vector<1x64xf32>
    %67 = arith.addf %65, %66 : vector<1x64xf32>
    %cst_22 = arith.constant 0.000000e+00 : f32
    %68 = vector.broadcast %cst_22 : f32 to vector<1x64xf32>
    %69 = arith.maximumf %67, %68 : vector<1x64xf32>
    %70 = arith.truncf %69 : vector<1x64xf32> to vector<1x64xbf16>
    %c0_23 = arith.constant 0 : index
    %c0_24 = arith.constant 0 : index
    %71 = vector.load %arg3[%c0_23, %c0_24] : memref<64x1xbf16, #tpu.memory_space<vmem>>, vector<64x1xbf16>
    %cst_25 = arith.constant dense<0.000000e+00> : vector<1x1xf32>
    %72 = tpu.matmul %70, %71, %cst_25 {dimension_numbers = #tpu.dot_dimension_numbers<[1], [0], [0], [1], [0, 0, 1, 1], [], []>} : vector<1x64xbf16>, vector<64x1xbf16>, vector<1x1xf32> -> vector<1x1xf32>
    %c4 = arith.constant 4 : index
    %73 = memref.load %arg5[%c4] : memref<5xf32, #tpu.memory_space<smem>>
    %74 = vector.broadcast %73 : f32 to vector<1x1xf32>
    %75 = arith.addf %72, %74 : vector<1x1xf32>
    %c0_26 = arith.constant 0 : index
    %c0_27 = arith.constant 0 : index
    %76 = vector.load %arg6[%c0_26, %c0_27] : memref<1x1xf32, #tpu.memory_space<vmem>>, vector<1x1xf32>
    tpu.vector_store %arg6[%c0_26, %c0_27], %75 {strides = array<i32>} : memref<1x1xf32, #tpu.memory_space<vmem>>, vector<1x1xf32>,
    return
  }
}

</mosaic_0001>

<llo_original>
// kernel: linear_stock_model_forward_batched.1
$region0: #{linear_stock_model_forward_batched.1}
  #allocation0 [shape = 'u32[]', space=smem, size = 0x4, offset = 0x4, fixed_abs, tag = 'smem constant byte address 0x4 - core index']
  #allocation1 [shape = 'u32[72,128]{1,0:T(1,128)}', space=vmem, size = 0x9000, scoped, tag = 'internal scratch']
  %s0 = inlined_call_operand.vmem [shape: f32[1,32], index: 0, kind: input, shape index: {}]
  %s1 = inlined_call_operand.vmem [shape: bf16[32,192], index: 1, kind: input, shape index: {}]
  %s2 = inlined_call_operand.vmem [shape: bf16[192,64], index: 2, kind: input, shape index: {}]
  %s3 = inlined_call_operand.vmem [shape: bf16[64,1], index: 3, kind: input, shape index: {}]
  %s4 = inlined_call_operand.vmem [shape: f32[1,256], index: 4, kind: input, shape index: {}]
  %s5 = inlined_call_operand.vmem [shape: f32[5], index: 5, kind: input, shape index: {}]
  %s6 = inlined_call_operand.hbm [shape: f32[1,1], index: 6, kind: output, shape index: {}]
  %s7 = sld [smem:[#allocation0]]
  $region38: #{linear_stock_model_forward_batched.1} parent=0
    _
  %s9 = ssub.s32 1, %s7
  %s10 = scalar_select 0, %s9, %s7
  $region1: #{linear_stock_model_forward_batched.1} parent=0
    #allocation2 [shape = 'u8[512]{0}', space=smem, size = 0x200, scoped, tag = 'input window, operand 5, single buffered']
    #allocation3 [shape = 's32[1]{0}', space=sflag, size = 0x4, scoped, tag = 'scoped memory for linear_stock_model_forward_batched.1']
    #allocation4 [shape = 's32[1]{0}', space=sflag, size = 0x4, scoped, tag = 'scoped memory for linear_stock_model_forward_batched.1']
    #allocation5 [shape = 'u8[512]{0}', space=vmem, size = 0x400, scoped, tag = 'output window, operand 0, single buffered']
    %11 = vsyncpa [#allocation4], 0
    %12 = vsyncpa [#allocation3], 0
    // Predicated region
    $region2: #{linear_stock_model_forward_batched.1} parent=1 // pred_check
      _
    $region3: #{linear_stock_model_forward_batched.1} parent=1 // pred_check_branch
      %14 = sbr.rel (0) target = $region5
    $region4: #{linear_stock_model_forward_batched.1} parent=1 // pred_region
      _
    $region5: #{linear_stock_model_forward_batched.1} parent=1 // pred_fallthru
      _
    // Predicated region
    $region6: #{linear_stock_model_forward_batched.1} parent=1 // pred_check
      _
    $region7: #{linear_stock_model_forward_batched.1} parent=1 // pred_check_branch
      %16 = sbr.rel (0) target = $region9
    $region8: #{linear_stock_model_forward_batched.1} parent=1 // pred_region
      _
    $region9: #{linear_stock_model_forward_batched.1} parent=1 // pred_fallthru
      _
    // Predicated region
    $region10: #{linear_stock_model_forward_batched.1} parent=1 // pred_check
      _
    $region11: #{linear_stock_model_forward_batched.1} parent=1 // pred_check_branch
      %18 = sbr.rel (0) target = $region13
    $region12: #{linear_stock_model_forward_batched.1} parent=1 // pred_region
      _
    $region13: #{linear_stock_model_forward_batched.1} parent=1 // pred_fallthru
      _
    // Predicated region
    $region14: #{linear_stock_model_forward_batched.1} parent=1 // pred_check
      _
    $region15: #{linear_stock_model_forward_batched.1} parent=1 // pred_check_branch
      %20 = sbr.rel (0) target = $region17
    $region16: #{linear_stock_model_forward_batched.1} parent=1 // pred_region
      _
    $region17: #{linear_stock_model_forward_batched.1} parent=1 // pred_fallthru
      _
    // Predicated region
    $region18: #{linear_stock_model_forward_batched.1} parent=1 // pred_check
      _
    $region19: #{linear_stock_model_forward_batched.1} parent=1 // pred_check_branch
      %22 = sbr.rel (0) target = $region21
    $region20: #{linear_stock_model_forward_batched.1} parent=1 // pred_region
      _
    $region21: #{linear_stock_model_forward_batched.1} parent=1 // pred_fallthru
      _
    // Predicated region
    $region22: #{linear_stock_model_forward_batched.1} parent=1 // pred_check
      _
    $region23: #{linear_stock_model_forward_batched.1} parent=1 // pred_check_branch
      %24 = sbr.rel (0) target = $region25
    $region24: #{linear_stock_model_forward_batched.1} parent=1 // pred_region
      %26 = vsyncadd [#allocation4], 0
      %s28 = sshll.u32 %s5, 4
      %s29 = int_to_ptr.vmem [resolvable:$true] %s28
      %31 = dma.vmem_to_smem %s29, 16, [#allocation2], [#allocation4]
    $region25: #{linear_stock_model_forward_batched.1} parent=1 // pred_fallthru
      _
    // Predicated region
    $region26: #{linear_stock_model_forward_batched.1} parent=1 // pred_check
      _
    $region27: #{linear_stock_model_forward_batched.1} parent=1 // pred_check_branch
      %33 = sbr.rel (0) target = $region29
    $region28: #{linear_stock_model_forward_batched.1} parent=1 // pred_region
      %35 = dma.done [#allocation4], 16
    $region29: #{linear_stock_model_forward_batched.1} parent=1 // pred_fallthru
      _
    %36 = sfence
    %v38 = vld [vmem:[%s0] sm:$0x1]
    %v39 = vpack.c.bf16 %v38, %v38
    %v40 = vld [vmem:[%s4] sm:$0x3]
    %v41 = vld [vmem:[%s1] sm:$0xff]
    %v42 = vld [vmem:[%s1 + $0x8] sm:$0xff]
    %v43 = vld [vmem:[%s1 + $0x10] sm:$0xff]
    %v44 = vld [vmem:[%s1 + $0x18] sm:$0xff]
    %v49 = vunpack.c.l.b16 %v41
    %v50 = vunpack.c.h.b16 %v41
    %v51 = vunpack.c.l.b16 %v42
    %v52 = vunpack.c.h.b16 %v42
    %v53 = vunpack.c.l.b16 %v43
    %v54 = vunpack.c.h.b16 %v43
    %v55 = vunpack.c.l.b16 %v44
    %v56 = vunpack.c.h.b16 %v44
    %v57 = vpack.c.b16 %v51, %v49
    %v58 = vpack.c.b16 %v52, %v50
    %v59 = vpack.c.b16 %v55, %v53
    %v60 = vpack.c.b16 %v56, %v54
    %v66 = vperm.slane %v40, 0
    %v67 = vperm.slane %v40, 1
    %vm70 = vcmask 261120
    %v72 = vsel %vm70, %v39, 0
    %74 = vmatpush.bf16.msra.mxu0 0
    %75 = vmatpush.bf16.msra.mxu0 0
    %76 = vmatpush.bf16.msra.mxu0 0
    %77 = vmatpush.bf16.msra.mxu0 0
    %78 = vmatpush.bf16.msra.mxu0 0
    %79 = vmatpush.bf16.msra.mxu0 0
    %80 = vmatpush.bf16.msra.mxu0 %v59
    %81 = vmatpush.bf16.msra.mxu0 %v57
    %82 = vmatmul.bf16.gmra.mxu0 %v72
    %v83 = vpop.f32.mrf.mxu0
    %v84 = vadd.f32 %v66, %v83
    %v85 = vpop.f32.mrf.mxu0
    %86 = vdwg.mxu0
    %87 = vmatpush.bf16.msra.mxu0 0
    %88 = vmatpush.bf16.msra.mxu0 0
    %89 = vmatpush.bf16.msra.mxu0 0
    %90 = vmatpush.bf16.msra.mxu0 0
    %91 = vmatpush.bf16.msra.mxu0 0
    %92 = vmatpush.bf16.msra.mxu0 0
    %93 = vmatpush.bf16.msra.mxu0 %v60
    %94 = vmatpush.bf16.msra.mxu0 %v58
    %95 = vmatmul.bf16.gmra.mxu0 %v72
    %v96 = vpop.f32.mrf.mxu0
    %v97 = vadd.f32 %v67, %v96
    %v98 = vpop.f32.mrf.mxu0
    %99 = vdwg.mxu0
    %vm100 = vcmask 1040384
    %v101 = vsel %vm100, %v84, 0.0
    %vm102 = vcmask 516096
    %v103 = vsel %vm102, %v97, 0.0
    %v104 = vadd.f32 %v101, %v103
    %105 = vadd.xlane.f32.xlu0 %v104
    %v106 = vpop.xlane.xlu0 %105
    %v107 = vrcp.pop 192.0
    %v108 = vmul.f32 192.0, %v107
    %v109 = vsub.f32 1.0, %v108
    %v110 = vmul.f32 %v107, %v109
    %v111 = vadd.f32 %v107, %v110
    %vm112 = vweird.f32 %v107
    %v113 = vsel %vm112, %v107, %v111
    %v114 = vmul.f32 %v106, %v113
    %v115 = vmul.f32 %v84, %v84
    %v116 = vmul.f32 %v97, %v97
    %v117 = vsel %vm100, %v115, 0.0
    %v118 = vsel %vm102, %v116, 0.0
    %v119 = vadd.f32 %v117, %v118
    %120 = vadd.xlane.f32.xlu0 %v119
    %v121 = vpop.xlane.xlu0 %120
    %v122 = vmul.f32 %v121, %v113
    %v123 = vmul.f32 %v114, %v114
    %v124 = vsub.f32 %v122, %v123
    %v125 = vmax.f32 %v124, 0.0
    %s126 = sld [smem:[#allocation2]]
    %v127 = vadd.f32 %v125, 1e-05
    %v128 = vrsqrt.pop %v127
    %v129 = vmul.f32 %v128, %v127
    %v130 = vmul.f32 %v129, %v128
    %v131 = vmul.f32 0.5, %v130
    %v132 = vsub.f32 1.5, %v131
    %v133 = vmul.f32 %v128, %v132
    %vm134 = vweird.f32 %v127
    %vm135 = vweird.f32 %v128
    %vm136 = vmor %vm134, %vm135
    %v137 = vsel %vm136, %v128, %v133
    %v138 = vstv %s126
    %v139 = vmul.f32 %v138, %v137
    %s140 = sld [smem:[#allocation2 + $0x1]]
    %v141 = vmul.f32 %v114, %v139
    %v142 = vstv %s140
    %v143 = vsub.f32 %v142, %v141
    %v144 = vmul.f32 %v84, %v139
    %v145 = vmul.f32 %v97, %v139
    %v146 = vadd.f32 %v144, %v143
    %v147 = vadd.f32 %v145, %v143
    %v148 = vmax.f32 %v146, 0.0
    %v149 = vmax.f32 %v147, 0.0
    %v150 = vpack.c.bf16 %v148, %v148
    %v151 = vpack.c.bf16 %v149, %v149
    %v152 = vld [vmem:[%s2] sm:$0xf]
    %v153 = vld [vmem:[%s2 + $0x4] sm:$0xf]
    %v154 = vld [vmem:[%s2 + $0x8] sm:$0xf]
    %v155 = vld [vmem:[%s2 + $0xc] sm:$0xf]
    %v156 = vld [vmem:[%s2 + $0x10] sm:$0xf]
    %v157 = vld [vmem:[%s2 + $0x14] sm:$0xf]
    %v158 = vld [vmem:[%s2 + $0x18] sm:$0xf]
    %v159 = vld [vmem:[%s2 + $0x1c] sm:$0xf]
    %v160 = vld [vmem:[%s2 + $0x20] sm:$0xf]
    %v161 = vld [vmem:[%s2 + $0x24] sm:$0xf]
    %v162 = vld [vmem:[%s2 + $0x28] sm:$0xf]
    %v163 = vld [vmem:[%s2 + $0x2c] sm:$0xf]
    %v164 = vld [vmem:[%s2 + $0x30] sm:$0xf]
    %v165 = vld [vmem:[%s2 + $0x34] sm:$0xf]
    %v166 = vld [vmem:[%s2 + $0x38] sm:$0xf]
    %v167 = vld [vmem:[%s2 + $0x3c] sm:$0xf]
    %v168 = vld [vmem:[%s2 + $0x40] sm:$0xf]
    %v169 = vld [vmem:[%s2 + $0x44] sm:$0xf]
    %v170 = vld [vmem:[%s2 + $0x48] sm:$0xf]
    %v171 = vld [vmem:[%s2 + $0x4c] sm:$0xf]
    %v172 = vld [vmem:[%s2 + $0x50] sm:$0xf]
    %v173 = vld [vmem:[%s2 + $0x54] sm:$0xf]
    %v174 = vld [vmem:[%s2 + $0x58] sm:$0xf]
    %v175 = vld [vmem:[%s2 + $0x5c] sm:$0xf]
    %v200 = vunpack.c.l.b16 %v152
    %v201 = vunpack.c.l.b16 %v153
    %v202 = vunpack.c.l.b16 %v154
    %v203 = vunpack.c.l.b16 %v155
    %v204 = vunpack.c.l.b16 %v156
    %v205 = vunpack.c.l.b16 %v157
    %v206 = vunpack.c.l.b16 %v158
    %v207 = vunpack.c.l.b16 %v159
    %v208 = vunpack.c.l.b16 %v160
    %v209 = vunpack.c.l.b16 %v161
    %v210 = vunpack.c.l.b16 %v162
    %v211 = vunpack.c.l.b16 %v163
    %v212 = vunpack.c.l.b16 %v164
    %v213 = vunpack.c.l.b16 %v165
    %v214 = vunpack.c.l.b16 %v166
    %v215 = vunpack.c.l.b16 %v167
    %v216 = vunpack.c.l.b16 %v168
    %v217 = vunpack.c.l.b16 %v169
    %v218 = vunpack.c.l.b16 %v170
    %v219 = vunpack.c.l.b16 %v171
    %v220 = vunpack.c.l.b16 %v172
    %v221 = vunpack.c.l.b16 %v173
    %v222 = vunpack.c.l.b16 %v174
    %v223 = vunpack.c.l.b16 %v175
    %v224 = vpack.c.b16 %v201, %v200
    %v225 = vpack.c.b16 %v203, %v202
    %v226 = vpack.c.b16 %v205, %v204
    %v227 = vpack.c.b16 %v207, %v206
    %v228 = vpack.c.b16 %v209, %v208
    %v229 = vpack.c.b16 %v211, %v210
    %v230 = vpack.c.b16 %v213, %v212
    %v231 = vpack.c.b16 %v215, %v214
    %v232 = vpack.c.b16 %v217, %v216
    %v233 = vpack.c.b16 %v219, %v218
    %v234 = vpack.c.b16 %v221, %v220
    %v235 = vpack.c.b16 %v223, %v222
    %248 = vrot.lane.b32.xlu0 %v67, 64
    %v249 = vpop.permute.xlu0 %248
    %vm251 = vcmask 523264
    %v253 = vsel %vm251, %v151, 0
    %255 = vmatpush.bf16.msra.mxu0 %v231
    %256 = vmatpush.bf16.msra.mxu0 %v230
    %257 = vmatpush.bf16.msra.mxu0 %v229
    %258 = vmatpush.bf16.msra.mxu0 %v228
    %259 = vmatpush.bf16.msra.mxu0 %v227
    %260 = vmatpush.bf16.msra.mxu0 %v226
    %261 = vmatpush.bf16.msra.mxu0 %v225
    %262 = vmatpush.bf16.msra.mxu0 %v224
    %263 = vmatmul.bf16.gmra.mxu0 %v150
    %v264 = vpop.f32.mrf.mxu0
    %v265 = vadd.f32 %v249, %v264
    %v266 = vpop.f32.mrf.mxu0
    %267 = vdwg.mxu0
    %268 = vmatpush.bf16.msra.mxu0 0
    %269 = vmatpush.bf16.msra.mxu0 0
    %270 = vmatpush.bf16.msra.mxu0 0
    %271 = vmatpush.bf16.msra.mxu0 0
    %272 = vmatpush.bf16.msra.mxu0 %v235
    %273 = vmatpush.bf16.msra.mxu0 %v234
    %274 = vmatpush.bf16.msra.mxu0 %v233
    %275 = vmatpush.bf16.msra.mxu0 %v232
    %276 = vmatmul.bf16.gmra.mxu0 %v253
    %v277 = vpop.f32.mrf.mxu0
    %v278 = vadd.f32 %v265, %v277
    %v279 = vpop.f32.mrf.mxu0
    %280 = vdwg.mxu0
    %v281 = vsel %vm102, %v278, 0.0
    %282 = vadd.xlane.f32.xlu0 %v281
    %v283 = vpop.xlane.xlu0 %282
    %v284 = vrcp.pop 64.0
    %v285 = vmul.f32 64.0, %v284
    %v286 = vsub.f32 1.0, %v285
    %v287 = vmul.f32 %v284, %v286
    %v288 = vadd.f32 %v284, %v287
    %vm289 = vweird.f32 %v284
    %v290 = vsel %vm289, %v284, %v288
    %v291 = vmul.f32 %v283, %v290
    %v292 = vmul.f32 %v278, %v278
    %v293 = vsel %vm102, %v292, 0.0
    %294 = vadd.xlane.f32.xlu0 %v293
    %v295 = vpop.xlane.xlu0 %294
    %v296 = vmul.f32 %v295, %v290
    %v297 = vmul.f32 %v291, %v291
    %v298 = vsub.f32 %v296, %v297
    %v299 = vmax.f32 %v298, 0.0
    %s300 = sld [smem:[#allocation2 + $0x2]]
    %v301 = vadd.f32 %v299, 1e-05
    %v302 = vrsqrt.pop %v301
    %v303 = vmul.f32 %v302, %v301
    %v304 = vmul.f32 %v303, %v302
    %v305 = vmul.f32 0.5, %v304
    %v306 = vsub.f32 1.5, %v305
    %v307 = vmul.f32 %v302, %v306
    %vm308 = vweird.f32 %v301
    %vm309 = vweird.f32 %v302
    %vm310 = vmor %vm308, %vm309
    %v311 = vsel %vm310, %v302, %v307
    %v312 = vstv %s300
    %v313 = vmul.f32 %v312, %v311
    %s314 = sld [smem:[#allocation2 + $0x3]]
    %v315 = vmul.f32 %v291, %v313
    %v316 = vstv %s314
    %v317 = vsub.f32 %v316, %v315
    %v318 = vmul.f32 %v278, %v313
    %v319 = vadd.f32 %v318, %v317
    %v320 = vmax.f32 %v319, 0.0
    %v321 = vpack.c.bf16 %v320, %v320
    %v322 = vld [vmem:[%s3] sm:$0xf]
    %v323 = vld [vmem:[%s3 + $0x4] sm:$0xf]
    %v324 = vld [vmem:[%s3 + $0x8] sm:$0xf]
    %v325 = vld [vmem:[%s3 + $0xc] sm:$0xf]
    %v326 = vld [vmem:[%s3 + $0x10] sm:$0xf]
    %v327 = vld [vmem:[%s3 + $0x14] sm:$0xf]
    %v328 = vld [vmem:[%s3 + $0x18] sm:$0xf]
    %v329 = vld [vmem:[%s3 + $0x1c] sm:$0xf]
    %s330 = sld [smem:[#allocation2 + $0x4]]
    %v331 = vstv %s330
    %v340 = vunpack.c.l.b16 %v322
    %v341 = vunpack.c.l.b16 %v323
    %v342 = vunpack.c.l.b16 %v324
    %v343 = vunpack.c.l.b16 %v325
    %v344 = vunpack.c.l.b16 %v326
    %v345 = vunpack.c.l.b16 %v327
    %v346 = vunpack.c.l.b16 %v328
    %v347 = vunpack.c.l.b16 %v329
    %v348 = vpack.c.b16 %v341, %v340
    %v349 = vpack.c.b16 %v343, %v342
    %v350 = vpack.c.b16 %v345, %v344
    %v351 = vpack.c.b16 %v347, %v346
    %v357 = vsel %vm251, %v321, 0
    %359 = vmatpush.bf16.msra.mxu0 0
    %360 = vmatpush.bf16.msra.mxu0 0
    %361 = vmatpush.bf16.msra.mxu0 0
    %362 = vmatpush.bf16.msra.mxu0 0
    %363 = vmatpush.bf16.msra.mxu0 %v351
    %364 = vmatpush.bf16.msra.mxu0 %v350
    %365 = vmatpush.bf16.msra.mxu0 %v349
    %366 = vmatpush.bf16.msra.mxu0 %v348
    %367 = vmatmul.bf16.gmra.mxu0 %v357
    %v368 = vpop.f32.mrf.mxu0
    %v369 = vadd.f32 %v331, %v368
    %v370 = vpop.f32.mrf.mxu0
    %371 = vdwg.mxu0
    %vm372 = vcmask 0
    %373 = vst.msk [vmem:[#allocation5] sm:$0x1] %vm372, %v369
    // Predicated region
    $region30: #{linear_stock_model_forward_batched.1} parent=1 // pred_check
      _
    $region31: #{linear_stock_model_forward_batched.1} parent=1 // pred_check_branch
      %375 = sbr.rel (0) target = $region33
    $region32: #{linear_stock_model_forward_batched.1} parent=1 // pred_region
      %377 = vsyncadd [#allocation3], 0
      %s379 = sshll.u32 [#allocation5], 4
      %s380 = int_to_ptr.vmem [resolvable:$true] %s379
      %s381 = sshll.u32 %s6, 4
      %s382 = int_to_ptr.hbm [resolvable:$true] %s381
      %384 = dma.vmem_to_hbm [thread:$0]  %s380, 16, %s382, [#allocation3]
    $region33: #{linear_stock_model_forward_batched.1} parent=1 // pred_fallthru
      _
    // Predicated region
    $region34: #{linear_stock_model_forward_batched.1} parent=1 // pred_check
      _
    $region35: #{linear_stock_model_forward_batched.1} parent=1 // pred_check_branch
      %386 = sbr.rel (0) target = $region37
    $region36: #{linear_stock_model_forward_batched.1} parent=1 // pred_region
      %388 = dma.done [#allocation3], 16
    $region37: #{linear_stock_model_forward_batched.1} parent=1 // pred_fallthru
      _
    %389 = vsyncpa [#allocation3], 1
    %390 = vsyncpa [#allocation4], 1

</llo_original>
